<compile_context>
chip_gen: v5e
topology: v5e:2x2
jax: 0.10.0
libtpu: 0.0.40
codegen_flags: <defaults>
</compile_context>

<pallas_src>
import functools

import jax
import jax.numpy as jnp
from jax.experimental import pallas as pl
from jax.experimental.pallas import tpu as pltpu


def mlp_kernel(x_ref, w1_ref, b1_ref, w2_ref, b2_ref, w3_ref, b3_ref,
               w4_ref, b4_ref, o_ref):
    # fc1 + relu (bf16 inputs, f32 accumulation on the MXU)
    h = jnp.dot(x_ref[...], w1_ref[...], preferred_element_type=jnp.float32)
    h = jnp.maximum(h + b1_ref[...], 0.0).astype(jnp.bfloat16)
    # fc2 + relu
    h = jnp.dot(h, w2_ref[...], preferred_element_type=jnp.float32)
    h = jnp.maximum(h + b2_ref[...], 0.0).astype(jnp.bfloat16)
    # fc3 + relu
    h = jnp.dot(h, w3_ref[...], preferred_element_type=jnp.float32)
    h = jnp.maximum(h + b3_ref[...], 0.0).astype(jnp.bfloat16)
    # fc4 (no relu), keep logits in f32
    logits = jnp.dot(h, w4_ref[...], preferred_element_type=jnp.float32)
    logits = logits + b4_ref[...]
    # log_softmax over the last (lane) axis
    m = jnp.max(logits, axis=-1, keepdims=True)
    shifted = logits - m
    lse = jnp.log(jnp.sum(jnp.exp(shifted), axis=-1, keepdims=True))
    o_ref[...] = (shifted - lse).astype(o_ref.dtype)


@functools.partial(jax.jit, static_argnames=("tm",))
def net_forward(x, params, *, tm=256):
    """x: (B, 784) float32 -> (B, 10) float32 log-probabilities."""
    (w1, b1), (w2, b2), (w3, b3), (w4, b4) = params
    B, D = x.shape
    assert D == 28 * 28

    # Batch tile: multiple of 8 sublanes, capped at `tm` (256 keeps the chained
    # (TM, 64) f32 activations well inside the 64-vreg file).
    TM = min(tm, max(8, ((B + 7) // 8) * 8))
    Bp = ((B + TM - 1) // TM) * TM

    x_bf = x.astype(jnp.bfloat16)
    if Bp != B:
        x_bf = jnp.pad(x_bf, ((0, Bp - B), (0, 0)))
    # Cast weights once outside the kernel; biases stay f32.
    w1, w2, w3, w4 = (w.astype(jnp.bfloat16) for w in (w1, w2, w3, w4))
    b1, b2, b3, b4 = (b.astype(jnp.float32) for b in (b1, b2, b3, b4))

    def pinned(shape):
        return pl.BlockSpec(shape, lambda i: (0, 0))

    flops = 2 * Bp * (784 * 64 + 64 * 64 + 64 * 64 + 64 * 10)
    bytes_accessed = (
        Bp * 784 * 2                                   # x (bf16)
        + (784 * 64 + 64 * 64 + 64 * 64 + 64 * 10) * 2  # weights (bf16)
        + (64 * 3 + 10) * 4                            # biases (f32)
        + Bp * 10 * 4)                                 # output (f32)

    out = pl.pallas_call(
        mlp_kernel,
        out_shape=jax.ShapeDtypeStruct((Bp, 10), jnp.float32),
        grid=(Bp // TM,),
        in_specs=[
            pl.BlockSpec((TM, 784), lambda i: (i, 0)),   # x: pipelined per tile
            pinned((784, 64)), pinned((1, 64)),          # fc1 (VMEM-resident)
            pinned((64, 64)), pinned((1, 64)),           # fc2
            pinned((64, 64)), pinned((1, 64)),           # fc3
            pinned((64, 10)), pinned((1, 10)),           # fc4
        ],
        out_specs=pl.BlockSpec((TM, 10), lambda i: (i, 0)),
        compiler_params=pltpu.CompilerParams(
            dimension_semantics=("parallel",),           # megacore on v7x
            vmem_limit_bytes=32 * 1024 * 1024),
        cost_estimate=pl.CostEstimate(
            flops=flops, transcendentals=Bp * 10,
            bytes_accessed=bytes_accessed),
    )(x_bf, w1, b1, w2, b2, w3, b3, w4, b4)
    return out[:B]


def init_params(key):
    """Deterministic init matching nn.Linear shapes.

    Weights stored as (in, out); biases as (1, out) for 2-D broadcast in VMEM.
    """
    dims = [(28 * 28, 64), (64, 64), (64, 64), (64, 10)]
    params = []
    for i, (din, dout) in enumerate(dims):
        kw, kb = jax.random.split(jax.random.fold_in(key, i))
        bound = 1.0 / jnp.sqrt(din)
        w = jax.random.uniform(kw, (din, dout), jnp.float32, -bound, bound)
        b = jax.random.uniform(kb, (1, dout), jnp.float32, -bound, bound)
        params.append((w, b))
    return params


def reference_forward(x, params):
    """Matched-precision reference: bf16 inputs/weights, f32 accumulation."""
    h = x.astype(jnp.bfloat16)
    for i, (w, b) in enumerate(params):
        h = jnp.dot(h, w.astype(jnp.bfloat16),
                    preferred_element_type=jnp.float32) + b
        if i < 3:
            h = jnp.maximum(h, 0.0).astype(jnp.bfloat16)
    return jax.nn.log_softmax(h, axis=1)


if __name__ == "__main__":
    key = jax.random.PRNGKey(0)
    kx, kp = jax.random.split(key)
    params = init_params(kp)

    # Small primary check (single tile).
    B = 8
    x = jax.random.normal(kx, (B, 28 * 28), jnp.float32)
    out = jax.block_until_ready(net_forward(x, params))
    ref = reference_forward(x, params)
    assert out.shape == (B, 10), out.shape
    err = float(jnp.max(jnp.abs(out - ref)))
    assert err < 2e-3, err

    # Multi-tile / padding path (grid > 1, B not a multiple of the tile).
    B2 = 300
    x2 = jax.random.normal(jax.random.fold_in(kx, 1), (B2, 28 * 28),
                           jnp.float32)
    out2 = jax.block_until_ready(net_forward(x2, params))
    ref2 = reference_forward(x2, params)
    assert out2.shape == (B2, 10), out2.shape
    err2 = float(jnp.max(jnp.abs(out2 - ref2)))
    assert err2 < 2e-3, err2

    print("KERNEL_OK")
</pallas_src>

<mosaic_0001>
module attributes {stable_mosaic.version = 11 : i64} {
  func.func @mlp_kernel(%arg0: i32, %arg1: memref<8x784xbf16, #tpu.memory_space<vmem>>, %arg2: memref<784x64xbf16, #tpu.memory_space<vmem>>, %arg3: memref<1x64xf32, #tpu.memory_space<vmem>>, %arg4: memref<64x64xbf16, #tpu.memory_space<vmem>>, %arg5: memref<1x64xf32, #tpu.memory_space<vmem>>, %arg6: memref<64x64xbf16, #tpu.memory_space<vmem>>, %arg7: memref<1x64xf32, #tpu.memory_space<vmem>>, %arg8: memref<64x10xbf16, #tpu.memory_space<vmem>>, %arg9: memref<1x10xf32, #tpu.memory_space<vmem>>, %arg10: memref<8x10xf32, #tpu.memory_space<vmem>>) attributes {dimension_semantics = [#tpu.dimension_semantics<parallel>], iteration_bounds = array<i64: 1>, scalar_prefetch = 0 : i64, scratch_operands = 0 : i64, tpu.core_type = #tpu.core_type<tc>, window_params = [{transform_indices = @transform_0, window_bounds = array<i64: 8, 784>}, {pipeline_mode = #tpu.pipeline_mode<synchronous>, transform_indices = @transform_1, window_bounds = array<i64: 784, 64>}, {pipeline_mode = #tpu.pipeline_mode<synchronous>, transform_indices = @transform_2, window_bounds = array<i64: 1, 64>}, {pipeline_mode = #tpu.pipeline_mode<synchronous>, transform_indices = @transform_3, window_bounds = array<i64: 64, 64>}, {pipeline_mode = #tpu.pipeline_mode<synchronous>, transform_indices = @transform_4, window_bounds = array<i64: 1, 64>}, {pipeline_mode = #tpu.pipeline_mode<synchronous>, transform_indices = @transform_5, window_bounds = array<i64: 64, 64>}, {pipeline_mode = #tpu.pipeline_mode<synchronous>, transform_indices = @transform_6, window_bounds = array<i64: 1, 64>}, {pipeline_mode = #tpu.pipeline_mode<synchronous>, transform_indices = @transform_7, window_bounds = array<i64: 64, 10>}, {pipeline_mode = #tpu.pipeline_mode<synchronous>, transform_indices = @transform_8, window_bounds = array<i64: 1, 10>}, {transform_indices = @transform_9, window_bounds = array<i64: 8, 10>}]} {
    %c0 = arith.constant 0 : index
    %c0_0 = arith.constant 0 : index
    %0 = vector.load %arg1[%c0, %c0_0] : memref<8x784xbf16, #tpu.memory_space<vmem>>, vector<8x784xbf16>
    %c0_1 = arith.constant 0 : index
    %c0_2 = arith.constant 0 : index
    %1 = vector.load %arg2[%c0_1, %c0_2] : memref<784x64xbf16, #tpu.memory_space<vmem>>, vector<784x64xbf16>
    %cst = arith.constant dense<0.000000e+00> : vector<8x64xf32>
    %2 = tpu.matmul %0, %1, %cst {dimension_numbers = #tpu.dot_dimension_numbers<[1], [0], [0], [1], [0, 0, 1, 1], [], []>} : vector<8x784xbf16>, vector<784x64xbf16>, vector<8x64xf32> -> vector<8x64xf32>
    %c0_3 = arith.constant 0 : index
    %c0_4 = arith.constant 0 : index
    %3 = vector.load %arg3[%c0_3, %c0_4] : memref<1x64xf32, #tpu.memory_space<vmem>>, vector<1x64xf32>
    %4 = vector.broadcast %3 : vector<1x64xf32> to vector<8x64xf32>
    %5 = arith.addf %2, %4 : vector<8x64xf32>
    %cst_5 = arith.constant 0.000000e+00 : f32
    %6 = vector.broadcast %cst_5 : f32 to vector<8x64xf32>
    %7 = arith.maximumf %5, %6 : vector<8x64xf32>
    %8 = arith.truncf %7 : vector<8x64xf32> to vector<8x64xbf16>
    %c0_6 = arith.constant 0 : index
    %c0_7 = arith.constant 0 : index
    %9 = vector.load %arg4[%c0_6, %c0_7] : memref<64x64xbf16, #tpu.memory_space<vmem>>, vector<64x64xbf16>
    %cst_8 = arith.constant dense<0.000000e+00> : vector<8x64xf32>
    %10 = tpu.matmul %8, %9, %cst_8 {dimension_numbers = #tpu.dot_dimension_numbers<[1], [0], [0], [1], [0, 0, 1, 1], [], []>} : vector<8x64xbf16>, vector<64x64xbf16>, vector<8x64xf32> -> vector<8x64xf32>
    %c0_9 = arith.constant 0 : index
    %c0_10 = arith.constant 0 : index
    %11 = vector.load %arg5[%c0_9, %c0_10] : memref<1x64xf32, #tpu.memory_space<vmem>>, vector<1x64xf32>
    %12 = vector.broadcast %11 : vector<1x64xf32> to vector<8x64xf32>
    %13 = arith.addf %10, %12 : vector<8x64xf32>
    %cst_11 = arith.constant 0.000000e+00 : f32
    %14 = vector.broadcast %cst_11 : f32 to vector<8x64xf32>
    %15 = arith.maximumf %13, %14 : vector<8x64xf32>
    %16 = arith.truncf %15 : vector<8x64xf32> to vector<8x64xbf16>
    %c0_12 = arith.constant 0 : index
    %c0_13 = arith.constant 0 : index
    %17 = vector.load %arg6[%c0_12, %c0_13] : memref<64x64xbf16, #tpu.memory_space<vmem>>, vector<64x64xbf16>
    %cst_14 = arith.constant dense<0.000000e+00> : vector<8x64xf32>
    %18 = tpu.matmul %16, %17, %cst_14 {dimension_numbers = #tpu.dot_dimension_numbers<[1], [0], [0], [1], [0, 0, 1, 1], [], []>} : vector<8x64xbf16>, vector<64x64xbf16>, vector<8x64xf32> -> vector<8x64xf32>
    %c0_15 = arith.constant 0 : index
    %c0_16 = arith.constant 0 : index
    %19 = vector.load %arg7[%c0_15, %c0_16] : memref<1x64xf32, #tpu.memory_space<vmem>>, vector<1x64xf32>
    %20 = vector.broadcast %19 : vector<1x64xf32> to vector<8x64xf32>
    %21 = arith.addf %18, %20 : vector<8x64xf32>
    %cst_17 = arith.constant 0.000000e+00 : f32
    %22 = vector.broadcast %cst_17 : f32 to vector<8x64xf32>
    %23 = arith.maximumf %21, %22 : vector<8x64xf32>
    %24 = arith.truncf %23 : vector<8x64xf32> to vector<8x64xbf16>
    %c0_18 = arith.constant 0 : index
    %c0_19 = arith.constant 0 : index
    %25 = vector.load %arg8[%c0_18, %c0_19] : memref<64x10xbf16, #tpu.memory_space<vmem>>, vector<64x10xbf16>
    %cst_20 = arith.constant dense<0.000000e+00> : vector<8x10xf32>
    %26 = tpu.matmul %24, %25, %cst_20 {dimension_numbers = #tpu.dot_dimension_numbers<[1], [0], [0], [1], [0, 0, 1, 1], [], []>} : vector<8x64xbf16>, vector<64x10xbf16>, vector<8x10xf32> -> vector<8x10xf32>
    %c0_21 = arith.constant 0 : index
    %c0_22 = arith.constant 0 : index
    %27 = vector.load %arg9[%c0_21, %c0_22] : memref<1x10xf32, #tpu.memory_space<vmem>>, vector<1x10xf32>
    %28 = vector.broadcast %27 : vector<1x10xf32> to vector<8x10xf32>
    %29 = arith.addf %26, %28 : vector<8x10xf32>
    %cst_23 = arith.constant dense<0xFF800000> : vector<8xf32>
    %30 = vector.multi_reduction <maximumf>, %29, %cst_23 [1] : vector<8x10xf32> to vector<8xf32>
    %31 = vector.shape_cast %30 : vector<8xf32> to vector<8x1xf32>
    %32 = vector.broadcast %31 : vector<8x1xf32> to vector<8x10xf32>
    %33 = arith.subf %29, %32 : vector<8x10xf32>
    %34 = math.exp %33 : vector<8x10xf32>
    %cst_24 = arith.constant dense<0.000000e+00> : vector<8xf32>
    %35 = vector.multi_reduction <add>, %34, %cst_24 [1] : vector<8x10xf32> to vector<8xf32>
    %36 = vector.shape_cast %35 : vector<8xf32> to vector<8x1xf32>
    %37 = math.log %36 : vector<8x1xf32>
    %38 = vector.broadcast %37 : vector<8x1xf32> to vector<8x10xf32>
    %39 = arith.subf %33, %38 : vector<8x10xf32>
    %c0_25 = arith.constant 0 : index
    %c0_26 = arith.constant 0 : index
    %40 = vector.load %arg10[%c0_25, %c0_26] : memref<8x10xf32, #tpu.memory_space<vmem>>, vector<8x10xf32>
    tpu.vector_store %arg10[%c0_25, %c0_26], %39 {strides = array<i32>} : memref<8x10xf32, #tpu.memory_space<vmem>>, vector<8x10xf32>,
    return
  }
  func.func @transform_0(%arg0: i32) -> (i32, i32) {
    %c0_i32 = arith.constant 0 : i32
    %c0_i32_0 = arith.constant 0 : i32
    return %arg0, %c0_i32 : i32, i32
  }
  func.func @transform_1(%arg0: i32) -> (i32, i32) {
    %c0_i32 = arith.constant 0 : i32
    %c0_i32_0 = arith.constant 0 : i32
    %c0_i32_1 = arith.constant 0 : i32
    return %c0_i32, %c0_i32_0 : i32, i32
  }
  func.func @transform_2(%arg0: i32) -> (i32, i32) {
    %c0_i32 = arith.constant 0 : i32
    %c0_i32_0 = arith.constant 0 : i32
    %c0_i32_1 = arith.constant 0 : i32
    return %c0_i32, %c0_i32_0 : i32, i32
  }
  func.func @transform_3(%arg0: i32) -> (i32, i32) {
    %c0_i32 = arith.constant 0 : i32
    %c0_i32_0 = arith.constant 0 : i32
    %c0_i32_1 = arith.constant 0 : i32
    return %c0_i32, %c0_i32_0 : i32, i32
  }
  func.func @transform_4(%arg0: i32) -> (i32, i32) {
    %c0_i32 = arith.constant 0 : i32
    %c0_i32_0 = arith.constant 0 : i32
    %c0_i32_1 = arith.constant 0 : i32
    return %c0_i32, %c0_i32_0 : i32, i32
  }
  func.func @transform_5(%arg0: i32) -> (i32, i32) {
    %c0_i32 = arith.constant 0 : i32
    %c0_i32_0 = arith.constant 0 : i32
    %c0_i32_1 = arith.constant 0 : i32
    return %c0_i32, %c0_i32_0 : i32, i32
  }
  func.func @transform_6(%arg0: i32) -> (i32, i32) {
    %c0_i32 = arith.constant 0 : i32
    %c0_i32_0 = arith.constant 0 : i32
    %c0_i32_1 = arith.constant 0 : i32
    return %c0_i32, %c0_i32_0 : i32, i32
  }
  func.func @transform_7(%arg0: i32) -> (i32, i32) {
    %c0_i32 = arith.constant 0 : i32
    %c0_i32_0 = arith.constant 0 : i32
    %c0_i32_1 = arith.constant 0 : i32
    return %c0_i32, %c0_i32_0 : i32, i32
  }
  func.func @transform_8(%arg0: i32) -> (i32, i32) {
    %c0_i32 = arith.constant 0 : i32
    %c0_i32_0 = arith.constant 0 : i32
    %c0_i32_1 = arith.constant 0 : i32
    return %c0_i32, %c0_i32_0 : i32, i32
  }
  func.func @transform_9(%arg0: i32) -> (i32, i32) {
    %c0_i32 = arith.constant 0 : i32
    %c0_i32_0 = arith.constant 0 : i32
    return %arg0, %c0_i32 : i32, i32
  }
}

</mosaic_0001>

<llo_original>
// kernel: net_forward.1
$region0: #{net_forward.1}
  #allocation0 [shape = 'u32[]', space=smem, size = 0x4, offset = 0x4, fixed_abs, tag = 'smem constant byte address 0x4 - core index']
  #allocation1 [shape = 'u32[72,128]{1,0:T(1,128)}', space=vmem, size = 0x9000, scoped, tag = 'internal scratch']
  %s0 = inlined_call_operand.vmem [shape: bf16[8,784], index: 0, kind: input, shape index: {}]
  %s1 = inlined_call_operand.vmem [shape: bf16[784,64], index: 1, kind: input, shape index: {}]
  %s2 = inlined_call_operand.vmem [shape: f32[1,64], index: 2, kind: input, shape index: {}]
  %s3 = inlined_call_operand.vmem [shape: bf16[64,64], index: 3, kind: input, shape index: {}]
  %s4 = inlined_call_operand.vmem [shape: f32[1,64], index: 4, kind: input, shape index: {}]
  %s5 = inlined_call_operand.vmem [shape: bf16[64,64], index: 5, kind: input, shape index: {}]
  %s6 = inlined_call_operand.vmem [shape: f32[1,64], index: 6, kind: input, shape index: {}]
  %s7 = inlined_call_operand.vmem [shape: bf16[64,10], index: 7, kind: input, shape index: {}]
  %s8 = inlined_call_operand.vmem [shape: f32[1,10], index: 8, kind: input, shape index: {}]
  %s9 = inlined_call_operand.hbm [shape: f32[8,10], index: 9, kind: output, shape index: {}]
  %s10 = sld [smem:[#allocation0]]
  $region46: #{net_forward.1} parent=0
    _
  %s12 = ssub.s32 1, %s10
  %s13 = scalar_select 0, %s12, %s10
  $region1: #{net_forward.1} parent=0
    #allocation2 [shape = 'u8[4096]{0}', space=vmem, size = 0x1000, scoped, tag = 'output window, operand 0, single buffered']
    #allocation3 [shape = 's32[1]{0}', space=sflag, size = 0x4, scoped, tag = 'scoped memory for net_forward.1']
    %14 = vsyncpa [#allocation3], 0
    // Predicated region
    $region2: #{net_forward.1} parent=1 // pred_check
      _
    $region3: #{net_forward.1} parent=1 // pred_check_branch
      %16 = sbr.rel (0) target = $region5
    $region4: #{net_forward.1} parent=1 // pred_region
      _
    $region5: #{net_forward.1} parent=1 // pred_fallthru
      _
    // Predicated region
    $region6: #{net_forward.1} parent=1 // pred_check
      _
    $region7: #{net_forward.1} parent=1 // pred_check_branch
      %18 = sbr.rel (0) target = $region9
    $region8: #{net_forward.1} parent=1 // pred_region
      _
    $region9: #{net_forward.1} parent=1 // pred_fallthru
      _
    // Predicated region
    $region10: #{net_forward.1} parent=1 // pred_check
      _
    $region11: #{net_forward.1} parent=1 // pred_check_branch
      %20 = sbr.rel (0) target = $region13
    $region12: #{net_forward.1} parent=1 // pred_region
      _
    $region13: #{net_forward.1} parent=1 // pred_fallthru
      _
    // Predicated region
    $region14: #{net_forward.1} parent=1 // pred_check
      _
    $region15: #{net_forward.1} parent=1 // pred_check_branch
      %22 = sbr.rel (0) target = $region17
    $region16: #{net_forward.1} parent=1 // pred_region
      _
    $region17: #{net_forward.1} parent=1 // pred_fallthru
      _
    // Predicated region
    $region18: #{net_forward.1} parent=1 // pred_check
      _
    $region19: #{net_forward.1} parent=1 // pred_check_branch
      %24 = sbr.rel (0) target = $region21
    $region20: #{net_forward.1} parent=1 // pred_region
      _
    $region21: #{net_forward.1} parent=1 // pred_fallthru
      _
    // Predicated region
    $region22: #{net_forward.1} parent=1 // pred_check
      _
    $region23: #{net_forward.1} parent=1 // pred_check_branch
      %26 = sbr.rel (0) target = $region25
    $region24: #{net_forward.1} parent=1 // pred_region
      _
    $region25: #{net_forward.1} parent=1 // pred_fallthru
      _
    // Predicated region
    $region26: #{net_forward.1} parent=1 // pred_check
      _
    $region27: #{net_forward.1} parent=1 // pred_check_branch
      %28 = sbr.rel (0) target = $region29
    $region28: #{net_forward.1} parent=1 // pred_region
      _
    $region29: #{net_forward.1} parent=1 // pred_fallthru
      _
    // Predicated region
    $region30: #{net_forward.1} parent=1 // pred_check
      _
    $region31: #{net_forward.1} parent=1 // pred_check_branch
      %30 = sbr.rel (0) target = $region33
    $region32: #{net_forward.1} parent=1 // pred_region
      _
    $region33: #{net_forward.1} parent=1 // pred_fallthru
      _
    // Predicated region
    $region34: #{net_forward.1} parent=1 // pred_check
      _
    $region35: #{net_forward.1} parent=1 // pred_check_branch
      %32 = sbr.rel (0) target = $region37
    $region36: #{net_forward.1} parent=1 // pred_region
      _
    $region37: #{net_forward.1} parent=1 // pred_fallthru
      _
    %v34 = vld [vmem:[%s0] sm:$0xff]
    %v35 = vld [vmem:[%s0 + $0x8] sm:$0xff]
    %v36 = vld [vmem:[%s0 + $0x10] sm:$0xff]
    %v37 = vld [vmem:[%s0 + $0x18] sm:$0xf]
    %v38 = vld [vmem:[%s1] sm:$0xf]
    %v39 = vld [vmem:[%s1 + $0x4] sm:$0xf]
    %v40 = vld [vmem:[%s1 + $0x8] sm:$0xf]
    %v41 = vld [vmem:[%s1 + $0xc] sm:$0xf]
    %v42 = vld [vmem:[%s1 + $0x10] sm:$0xf]
    %v43 = vld [vmem:[%s1 + $0x14] sm:$0xf]
    %v44 = vld [vmem:[%s1 + $0x18] sm:$0xf]
    %v45 = vld [vmem:[%s1 + $0x1c] sm:$0xf]
    %v46 = vld [vmem:[%s1 + $0x20] sm:$0xf]
    %v47 = vld [vmem:[%s1 + $0x24] sm:$0xf]
    %v48 = vld [vmem:[%s1 + $0x28] sm:$0xf]
    %v49 = vld [vmem:[%s1 + $0x2c] sm:$0xf]
    %v50 = vld [vmem:[%s1 + $0x30] sm:$0xf]
    %v51 = vld [vmem:[%s1 + $0x34] sm:$0xf]
    %v52 = vld [vmem:[%s1 + $0x38] sm:$0xf]
    %v53 = vld [vmem:[%s1 + $0x3c] sm:$0xf]
    %v54 = vld [vmem:[%s1 + $0x40] sm:$0xf]
    %v55 = vld [vmem:[%s1 + $0x44] sm:$0xf]
    %v56 = vld [vmem:[%s1 + $0x48] sm:$0xf]
    %v57 = vld [vmem:[%s1 + $0x4c] sm:$0xf]
    %v58 = vld [vmem:[%s1 + $0x50] sm:$0xf]
    %v59 = vld [vmem:[%s1 + $0x54] sm:$0xf]
    %v60 = vld [vmem:[%s1 + $0x58] sm:$0xf]
    %v61 = vld [vmem:[%s1 + $0x5c] sm:$0xf]
    %v62 = vld [vmem:[%s1 + $0x60] sm:$0xf]
    %v63 = vld [vmem:[%s1 + $0x64] sm:$0xf]
    %v64 = vld [vmem:[%s1 + $0x68] sm:$0xf]
    %v65 = vld [vmem:[%s1 + $0x6c] sm:$0xf]
    %v66 = vld [vmem:[%s1 + $0x70] sm:$0xf]
    %v67 = vld [vmem:[%s1 + $0x74] sm:$0xf]
    %v68 = vld [vmem:[%s1 + $0x78] sm:$0xf]
    %v69 = vld [vmem:[%s1 + $0x7c] sm:$0xf]
    %v70 = vld [vmem:[%s1 + $0x80] sm:$0xf]
    %v71 = vld [vmem:[%s1 + $0x84] sm:$0xf]
    %v72 = vld [vmem:[%s1 + $0x88] sm:$0xf]
    %v73 = vld [vmem:[%s1 + $0x8c] sm:$0xf]
    %v74 = vld [vmem:[%s1 + $0x90] sm:$0xf]
    %v75 = vld [vmem:[%s1 + $0x94] sm:$0xf]
    %v76 = vld [vmem:[%s1 + $0x98] sm:$0xf]
    %v77 = vld [vmem:[%s1 + $0x9c] sm:$0xf]
    %v78 = vld [vmem:[%s1 + $0xa0] sm:$0xf]
    %v79 = vld [vmem:[%s1 + $0xa4] sm:$0xf]
    %v80 = vld [vmem:[%s1 + $0xa8] sm:$0xf]
    %v81 = vld [vmem:[%s1 + $0xac] sm:$0xf]
    %v82 = vld [vmem:[%s1 + $0xb0] sm:$0xf]
    %v83 = vld [vmem:[%s1 + $0xb4] sm:$0xf]
    %v84 = vld [vmem:[%s1 + $0xb8] sm:$0xf]
    %v85 = vld [vmem:[%s1 + $0xbc] sm:$0xf]
    %v86 = vld [vmem:[%s1 + $0xc0] sm:$0xf]
    %v87 = vld [vmem:[%s1 + $0xc4] sm:$0xf]
    %v88 = vld [vmem:[%s1 + $0xc8] sm:$0xf]
    %v89 = vld [vmem:[%s1 + $0xcc] sm:$0xf]
    %v90 = vld [vmem:[%s1 + $0xd0] sm:$0xf]
    %v91 = vld [vmem:[%s1 + $0xd4] sm:$0xf]
    %v92 = vld [vmem:[%s1 + $0xd8] sm:$0xf]
    %v93 = vld [vmem:[%s1 + $0xdc] sm:$0xf]
    %v94 = vld [vmem:[%s1 + $0xe0] sm:$0xf]
    %v95 = vld [vmem:[%s1 + $0xe4] sm:$0xf]
    %v96 = vld [vmem:[%s1 + $0xe8] sm:$0xf]
    %v97 = vld [vmem:[%s1 + $0xec] sm:$0xf]
    %v98 = vld [vmem:[%s1 + $0xf0] sm:$0xf]
    %v99 = vld [vmem:[%s1 + $0xf4] sm:$0xf]
    %v100 = vld [vmem:[%s1 + $0xf8] sm:$0xf]
    %v101 = vld [vmem:[%s1 + $0xfc] sm:$0xf]
    %v102 = vld [vmem:[%s1 + $0x100] sm:$0xf]
    %v103 = vld [vmem:[%s1 + $0x104] sm:$0xf]
    %v104 = vld [vmem:[%s1 + $0x108] sm:$0xf]
    %v105 = vld [vmem:[%s1 + $0x10c] sm:$0xf]
    %v106 = vld [vmem:[%s1 + $0x110] sm:$0xf]
    %v107 = vld [vmem:[%s1 + $0x114] sm:$0xf]
    %v108 = vld [vmem:[%s1 + $0x118] sm:$0xf]
    %v109 = vld [vmem:[%s1 + $0x11c] sm:$0xf]
    %v110 = vld [vmem:[%s1 + $0x120] sm:$0xf]
    %v111 = vld [vmem:[%s1 + $0x124] sm:$0xf]
    %v112 = vld [vmem:[%s1 + $0x128] sm:$0xf]
    %v113 = vld [vmem:[%s1 + $0x12c] sm:$0xf]
    %v114 = vld [vmem:[%s1 + $0x130] sm:$0xf]
    %v115 = vld [vmem:[%s1 + $0x134] sm:$0xf]
    %v116 = vld [vmem:[%s1 + $0x138] sm:$0xf]
    %v117 = vld [vmem:[%s1 + $0x13c] sm:$0xf]
    %v118 = vld [vmem:[%s1 + $0x140] sm:$0xf]
    %v119 = vld [vmem:[%s1 + $0x144] sm:$0xf]
    %v120 = vld [vmem:[%s1 + $0x148] sm:$0xf]
    %v121 = vld [vmem:[%s1 + $0x14c] sm:$0xf]
    %v122 = vld [vmem:[%s1 + $0x150] sm:$0xf]
    %v123 = vld [vmem:[%s1 + $0x154] sm:$0xf]
    %v124 = vld [vmem:[%s1 + $0x158] sm:$0xf]
    %v125 = vld [vmem:[%s1 + $0x15c] sm:$0xf]
    %v126 = vld [vmem:[%s1 + $0x160] sm:$0xf]
    %v127 = vld [vmem:[%s1 + $0x164] sm:$0xf]
    %v128 = vld [vmem:[%s1 + $0x168] sm:$0xf]
    %v129 = vld [vmem:[%s1 + $0x16c] sm:$0xf]
    %v130 = vld [vmem:[%s1 + $0x170] sm:$0xf]
    %v131 = vld [vmem:[%s1 + $0x174] sm:$0xf]
    %v132 = vld [vmem:[%s1 + $0x178] sm:$0xf]
    %v133 = vld [vmem:[%s1 + $0x17c] sm:$0xf]
    %v134 = vld [vmem:[%s1 + $0x180] sm:$0xf]
    %v135 = vld [vmem:[%s1 + $0x184] sm:$0xf]
    %v136 = vld [vmem:[%s2] sm:$0x1]
    %v138 = vperm.slane %v136, 0
    %v144 = vunpack.c.l.b16 %v34
    %v145 = vunpack.c.h.b16 %v34
    %v146 = vunpack.c.l.b16 %v35
    %v147 = vunpack.c.h.b16 %v35
    %v148 = vunpack.c.l.b16 %v36
    %v149 = vunpack.c.h.b16 %v36
    %v150 = vunpack.c.l.b16 %v37
    %v151 = vpack.c.b16 %v144, %v144
    %v152 = vpack.c.b16 %v145, %v145
    %v153 = vpack.c.b16 %v146, %v146
    %v154 = vpack.c.b16 %v147, %v147
    %v155 = vpack.c.b16 %v148, %v148
    %v156 = vpack.c.b16 %v149, %v149
    %v157 = vpack.c.b16 %v150, %v150
    %v262 = vunpack.c.l.b16 %v38
    %v263 = vunpack.c.l.b16 %v39
    %v264 = vunpack.c.l.b16 %v40
    %v265 = vunpack.c.l.b16 %v41
    %v266 = vunpack.c.l.b16 %v42
    %v267 = vunpack.c.l.b16 %v43
    %v268 = vunpack.c.l.b16 %v44
    %v269 = vunpack.c.l.b16 %v45
    %v270 = vunpack.c.l.b16 %v46
    %v271 = vunpack.c.l.b16 %v47
    %v272 = vunpack.c.l.b16 %v48
    %v273 = vunpack.c.l.b16 %v49
    %v274 = vunpack.c.l.b16 %v50
    %v275 = vunpack.c.l.b16 %v51
    %v276 = vunpack.c.l.b16 %v52
    %v277 = vunpack.c.l.b16 %v53
    %v278 = vunpack.c.l.b16 %v54
    %v279 = vunpack.c.l.b16 %v55
    %v280 = vunpack.c.l.b16 %v56
    %v281 = vunpack.c.l.b16 %v57
    %v282 = vunpack.c.l.b16 %v58
    %v283 = vunpack.c.l.b16 %v59
    %v284 = vunpack.c.l.b16 %v60
    %v285 = vunpack.c.l.b16 %v61
    %v286 = vunpack.c.l.b16 %v62
    %v287 = vunpack.c.l.b16 %v63
    %v288 = vunpack.c.l.b16 %v64
    %v289 = vunpack.c.l.b16 %v65
    %v290 = vunpack.c.l.b16 %v66
    %v291 = vunpack.c.l.b16 %v67
    %v292 = vunpack.c.l.b16 %v68
    %v293 = vunpack.c.l.b16 %v69
    %v294 = vunpack.c.l.b16 %v70
    %v295 = vunpack.c.l.b16 %v71
    %v296 = vunpack.c.l.b16 %v72
    %v297 = vunpack.c.l.b16 %v73
    %v298 = vunpack.c.l.b16 %v74
    %v299 = vunpack.c.l.b16 %v75
    %v300 = vunpack.c.l.b16 %v76
    %v301 = vunpack.c.l.b16 %v77
    %v302 = vunpack.c.l.b16 %v78
    %v303 = vunpack.c.l.b16 %v79
    %v304 = vunpack.c.l.b16 %v80
    %v305 = vunpack.c.l.b16 %v81
    %v306 = vunpack.c.l.b16 %v82
    %v307 = vunpack.c.l.b16 %v83
    %v308 = vunpack.c.l.b16 %v84
    %v309 = vunpack.c.l.b16 %v85
    %v310 = vunpack.c.l.b16 %v86
    %v311 = vunpack.c.l.b16 %v87
    %v312 = vunpack.c.l.b16 %v88
    %v313 = vunpack.c.l.b16 %v89
    %v314 = vunpack.c.l.b16 %v90
    %v315 = vunpack.c.l.b16 %v91
    %v316 = vunpack.c.l.b16 %v92
    %v317 = vunpack.c.l.b16 %v93
    %v318 = vunpack.c.l.b16 %v94
    %v319 = vunpack.c.l.b16 %v95
    %v320 = vunpack.c.l.b16 %v96
    %v321 = vunpack.c.l.b16 %v97
    %v322 = vunpack.c.l.b16 %v98
    %v323 = vunpack.c.l.b16 %v99
    %v324 = vunpack.c.l.b16 %v100
    %v325 = vunpack.c.l.b16 %v101
    %v326 = vunpack.c.l.b16 %v102
    %v327 = vunpack.c.l.b16 %v103
    %v328 = vunpack.c.l.b16 %v104
    %v329 = vunpack.c.l.b16 %v105
    %v330 = vunpack.c.l.b16 %v106
    %v331 = vunpack.c.l.b16 %v107
    %v332 = vunpack.c.l.b16 %v108
    %v333 = vunpack.c.l.b16 %v109
    %v334 = vunpack.c.l.b16 %v110
    %v335 = vunpack.c.l.b16 %v111
    %v336 = vunpack.c.l.b16 %v112
    %v337 = vunpack.c.l.b16 %v113
    %v338 = vunpack.c.l.b16 %v114
    %v339 = vunpack.c.l.b16 %v115
    %v340 = vunpack.c.l.b16 %v116
    %v341 = vunpack.c.l.b16 %v117
    %v342 = vunpack.c.l.b16 %v118
    %v343 = vunpack.c.l.b16 %v119
    %v344 = vunpack.c.l.b16 %v120
    %v345 = vunpack.c.l.b16 %v121
    %v346 = vunpack.c.l.b16 %v122
    %v347 = vunpack.c.l.b16 %v123
    %v348 = vunpack.c.l.b16 %v124
    %v349 = vunpack.c.l.b16 %v125
    %v350 = vunpack.c.l.b16 %v126
    %v351 = vunpack.c.l.b16 %v127
    %v352 = vunpack.c.l.b16 %v128
    %v353 = vunpack.c.l.b16 %v129
    %v354 = vunpack.c.l.b16 %v130
    %v355 = vunpack.c.l.b16 %v131
    %v356 = vunpack.c.l.b16 %v132
    %v357 = vunpack.c.l.b16 %v133
    %v358 = vunpack.c.l.b16 %v134
    %v359 = vunpack.c.l.b16 %v135
    %v360 = vpack.c.b16 %v263, %v262
    %v361 = vpack.c.b16 %v265, %v264
    %v362 = vpack.c.b16 %v267, %v266
    %v363 = vpack.c.b16 %v269, %v268
    %v364 = vpack.c.b16 %v271, %v270
    %v365 = vpack.c.b16 %v273, %v272
    %v366 = vpack.c.b16 %v275, %v274
    %v367 = vpack.c.b16 %v277, %v276
    %v368 = vpack.c.b16 %v279, %v278
    %v369 = vpack.c.b16 %v281, %v280
    %v370 = vpack.c.b16 %v283, %v282
    %v371 = vpack.c.b16 %v285, %v284
    %v372 = vpack.c.b16 %v287, %v286
    %v373 = vpack.c.b16 %v289, %v288
    %v374 = vpack.c.b16 %v291, %v290
    %v375 = vpack.c.b16 %v293, %v292
    %v376 = vpack.c.b16 %v295, %v294
    %v377 = vpack.c.b16 %v297, %v296
    %v378 = vpack.c.b16 %v299, %v298
    %v379 = vpack.c.b16 %v301, %v300
    %v380 = vpack.c.b16 %v303, %v302
    %v381 = vpack.c.b16 %v305, %v304
    %v382 = vpack.c.b16 %v307, %v306
    %v383 = vpack.c.b16 %v309, %v308
    %v384 = vpack.c.b16 %v311, %v310
    %v385 = vpack.c.b16 %v313, %v312
    %v386 = vpack.c.b16 %v315, %v314
    %v387 = vpack.c.b16 %v317, %v316
    %v388 = vpack.c.b16 %v319, %v318
    %v389 = vpack.c.b16 %v321, %v320
    %v390 = vpack.c.b16 %v323, %v322
    %v391 = vpack.c.b16 %v325, %v324
    %v392 = vpack.c.b16 %v327, %v326
    %v393 = vpack.c.b16 %v329, %v328
    %v394 = vpack.c.b16 %v331, %v330
    %v395 = vpack.c.b16 %v333, %v332
    %v396 = vpack.c.b16 %v335, %v334
    %v397 = vpack.c.b16 %v337, %v336
    %v398 = vpack.c.b16 %v339, %v338
    %v399 = vpack.c.b16 %v341, %v340
    %v400 = vpack.c.b16 %v343, %v342
    %v401 = vpack.c.b16 %v345, %v344
    %v402 = vpack.c.b16 %v347, %v346
    %v403 = vpack.c.b16 %v349, %v348
    %v404 = vpack.c.b16 %v351, %v350
    %v405 = vpack.c.b16 %v353, %v352
    %v406 = vpack.c.b16 %v355, %v354
    %v407 = vpack.c.b16 %v357, %v356
    %v408 = vpack.c.b16 %v359, %v358
    %vm458 = vcmask 130048
    %v460 = vsel %vm458, %v157, 0
    %462 = vmatpush.bf16.msra.mxu0 %v367
    %463 = vmatpush.bf16.msra.mxu0 %v366
    %464 = vmatpush.bf16.msra.mxu0 %v365
    %465 = vmatpush.bf16.msra.mxu0 %v364
    %466 = vmatpush.bf16.msra.mxu0 %v363
    %467 = vmatpush.bf16.msra.mxu0 %v362
    %468 = vmatpush.bf16.msra.mxu0 %v361
    %469 = vmatpush.bf16.msra.mxu0 %v360
    %470 = vmatmul.bf16.gmra.mxu0 %v151
    %v471 = vpop.f32.mrf.mxu0
    %v472 = vadd.f32 %v138, %v471
    %v473 = vpop.f32.mrf.mxu0
    %474 = vdwg.mxu0
    %475 = vmatpush.bf16.msra.mxu0 %v375
    %476 = vmatpush.bf16.msra.mxu0 %v374
    %477 = vmatpush.bf16.msra.mxu0 %v373
    %478 = vmatpush.bf16.msra.mxu0 %v372
    %479 = vmatpush.bf16.msra.mxu0 %v371
    %480 = vmatpush.bf16.msra.mxu0 %v370
    %481 = vmatpush.bf16.msra.mxu0 %v369
    %482 = vmatpush.bf16.msra.mxu0 %v368
    %483 = vmatmul.bf16.gmra.mxu0 %v152
    %v484 = vpop.f32.mrf.mxu0
    %v485 = vadd.f32 %v472, %v484
    %v486 = vpop.f32.mrf.mxu0
    %487 = vdwg.mxu0
    %488 = vmatpush.bf16.msra.mxu0 %v383
    %489 = vmatpush.bf16.msra.mxu0 %v382
    %490 = vmatpush.bf16.msra.mxu0 %v381
    %491 = vmatpush.bf16.msra.mxu0 %v380
    %492 = vmatpush.bf16.msra.mxu0 %v379
    %493 = vmatpush.bf16.msra.mxu0 %v378
    %494 = vmatpush.bf16.msra.mxu0 %v377
    %495 = vmatpush.bf16.msra.mxu0 %v376
    %496 = vmatmul.bf16.gmra.mxu0 %v153
    %v497 = vpop.f32.mrf.mxu0
    %v498 = vadd.f32 %v485, %v497
    %v499 = vpop.f32.mrf.mxu0
    %500 = vdwg.mxu0
    %501 = vmatpush.bf16.msra.mxu0 %v391
    %502 = vmatpush.bf16.msra.mxu0 %v390
    %503 = vmatpush.bf16.msra.mxu0 %v389
    %504 = vmatpush.bf16.msra.mxu0 %v388
    %505 = vmatpush.bf16.msra.mxu0 %v387
    %506 = vmatpush.bf16.msra.mxu0 %v386
    %507 = vmatpush.bf16.msra.mxu0 %v385
    %508 = vmatpush.bf16.msra.mxu0 %v384
    %509 = vmatmul.bf16.gmra.mxu0 %v154
    %v510 = vpop.f32.mrf.mxu0
    %v511 = vadd.f32 %v498, %v510
    %v512 = vpop.f32.mrf.mxu0
    %513 = vdwg.mxu0
    %514 = vmatpush.bf16.msra.mxu0 %v399
    %515 = vmatpush.bf16.msra.mxu0 %v398
    %516 = vmatpush.bf16.msra.mxu0 %v397
    %517 = vmatpush.bf16.msra.mxu0 %v396
    %518 = vmatpush.bf16.msra.mxu0 %v395
    %519 = vmatpush.bf16.msra.mxu0 %v394
    %520 = vmatpush.bf16.msra.mxu0 %v393
    %521 = vmatpush.bf16.msra.mxu0 %v392
    %522 = vmatmul.bf16.gmra.mxu0 %v155
    %v523 = vpop.f32.mrf.mxu0
    %v524 = vadd.f32 %v511, %v523
    %v525 = vpop.f32.mrf.mxu0
    %526 = vdwg.mxu0
    %527 = vmatpush.bf16.msra.mxu0 %v407
    %528 = vmatpush.bf16.msra.mxu0 %v406
    %529 = vmatpush.bf16.msra.mxu0 %v405
    %530 = vmatpush.bf16.msra.mxu0 %v404
    %531 = vmatpush.bf16.msra.mxu0 %v403
    %532 = vmatpush.bf16.msra.mxu0 %v402
    %533 = vmatpush.bf16.msra.mxu0 %v401
    %534 = vmatpush.bf16.msra.mxu0 %v400
    %535 = vmatmul.bf16.gmra.mxu0 %v156
    %v536 = vpop.f32.mrf.mxu0
    %v537 = vadd.f32 %v524, %v536
    %v538 = vpop.f32.mrf.mxu0
    %539 = vdwg.mxu0
    %540 = vmatpush.bf16.msra.mxu0 0
    %541 = vmatpush.bf16.msra.mxu0 0
    %542 = vmatpush.bf16.msra.mxu0 0
    %543 = vmatpush.bf16.msra.mxu0 0
    %544 = vmatpush.bf16.msra.mxu0 0
    %545 = vmatpush.bf16.msra.mxu0 0
    %546 = vmatpush.bf16.msra.mxu0 0
    %547 = vmatpush.bf16.msra.mxu0 %v408
    %548 = vmatmul.bf16.gmra.mxu0 %v460
    %v549 = vpop.f32.mrf.mxu0
    %v550 = vadd.f32 %v537, %v549
    %v551 = vpop.f32.mrf.mxu0
    %552 = vdwg.mxu0
    %v553 = vmax.f32 %v550, 0.0
    %v554 = vpack.c.bf16 %v553, %v553
    %v555 = vld [vmem:[%s3] sm:$0xf]
    %v556 = vld [vmem:[%s3 + $0x4] sm:$0xf]
    %v557 = vld [vmem:[%s3 + $0x8] sm:$0xf]
    %v558 = vld [vmem:[%s3 + $0xc] sm:$0xf]
    %v559 = vld [vmem:[%s3 + $0x10] sm:$0xf]
    %v560 = vld [vmem:[%s3 + $0x14] sm:$0xf]
    %v561 = vld [vmem:[%s3 + $0x18] sm:$0xf]
    %v562 = vld [vmem:[%s3 + $0x1c] sm:$0xf]
    %v563 = vld [vmem:[%s4] sm:$0x1]
    %v565 = vperm.slane %v563, 0
    %v575 = vunpack.c.l.b16 %v555
    %v576 = vunpack.c.l.b16 %v556
    %v577 = vunpack.c.l.b16 %v557
    %v578 = vunpack.c.l.b16 %v558
    %v579 = vunpack.c.l.b16 %v559
    %v580 = vunpack.c.l.b16 %v560
    %v581 = vunpack.c.l.b16 %v561
    %v582 = vunpack.c.l.b16 %v562
    %v583 = vpack.c.b16 %v576, %v575
    %v584 = vpack.c.b16 %v578, %v577
    %v585 = vpack.c.b16 %v580, %v579
    %v586 = vpack.c.b16 %v582, %v581
    %vm591 = vcmask 523264
    %v593 = vsel %vm591, %v554, 0
    %595 = vmatpush.bf16.msra.mxu0 0
    %596 = vmatpush.bf16.msra.mxu0 0
    %597 = vmatpush.bf16.msra.mxu0 0
    %598 = vmatpush.bf16.msra.mxu0 0
    %599 = vmatpush.bf16.msra.mxu0 %v586
    %600 = vmatpush.bf16.msra.mxu0 %v585
    %601 = vmatpush.bf16.msra.mxu0 %v584
    %602 = vmatpush.bf16.msra.mxu0 %v583
    %603 = vmatmul.bf16.gmra.mxu0 %v593
    %v604 = vpop.f32.mrf.mxu0
    %v605 = vadd.f32 %v565, %v604
    %v606 = vpop.f32.mrf.mxu0
    %607 = vdwg.mxu0
    %v608 = vmax.f32 %v605, 0.0
    %v609 = vpack.c.bf16 %v608, %v608
    %v610 = vld [vmem:[%s5] sm:$0xf]
    %v611 = vld [vmem:[%s5 + $0x4] sm:$0xf]
    %v612 = vld [vmem:[%s5 + $0x8] sm:$0xf]
    %v613 = vld [vmem:[%s5 + $0xc] sm:$0xf]
    %v614 = vld [vmem:[%s5 + $0x10] sm:$0xf]
    %v615 = vld [vmem:[%s5 + $0x14] sm:$0xf]
    %v616 = vld [vmem:[%s5 + $0x18] sm:$0xf]
    %v617 = vld [vmem:[%s5 + $0x1c] sm:$0xf]
    %v618 = vld [vmem:[%s6] sm:$0x1]
    %v620 = vperm.slane %v618, 0
    %v630 = vunpack.c.l.b16 %v610
    %v631 = vunpack.c.l.b16 %v611
    %v632 = vunpack.c.l.b16 %v612
    %v633 = vunpack.c.l.b16 %v613
    %v634 = vunpack.c.l.b16 %v614
    %v635 = vunpack.c.l.b16 %v615
    %v636 = vunpack.c.l.b16 %v616
    %v637 = vunpack.c.l.b16 %v617
    %v638 = vpack.c.b16 %v631, %v630
    %v639 = vpack.c.b16 %v633, %v632
    %v640 = vpack.c.b16 %v635, %v634
    %v641 = vpack.c.b16 %v637, %v636
    %v647 = vsel %vm591, %v609, 0
    %649 = vmatpush.bf16.msra.mxu0 0
    %650 = vmatpush.bf16.msra.mxu0 0
    %651 = vmatpush.bf16.msra.mxu0 0
    %652 = vmatpush.bf16.msra.mxu0 0
    %653 = vmatpush.bf16.msra.mxu0 %v641
    %654 = vmatpush.bf16.msra.mxu0 %v640
    %655 = vmatpush.bf16.msra.mxu0 %v639
    %656 = vmatpush.bf16.msra.mxu0 %v638
    %657 = vmatmul.bf16.gmra.mxu0 %v647
    %v658 = vpop.f32.mrf.mxu0
    %v659 = vadd.f32 %v620, %v658
    %v660 = vpop.f32.mrf.mxu0
    %661 = vdwg.mxu0
    %v662 = vmax.f32 %v659, 0.0
    %v663 = vpack.c.bf16 %v662, %v662
    %v664 = vld [vmem:[%s7] sm:$0xf]
    %v665 = vld [vmem:[%s7 + $0x4] sm:$0xf]
    %v666 = vld [vmem:[%s7 + $0x8] sm:$0xf]
    %v667 = vld [vmem:[%s7 + $0xc] sm:$0xf]
    %v668 = vld [vmem:[%s7 + $0x10] sm:$0xf]
    %v669 = vld [vmem:[%s7 + $0x14] sm:$0xf]
    %v670 = vld [vmem:[%s7 + $0x18] sm:$0xf]
    %v671 = vld [vmem:[%s7 + $0x1c] sm:$0xf]
    %v672 = vld [vmem:[%s8] sm:$0x1]
    %v674 = vperm.slane %v672, 0
    %v684 = vunpack.c.l.b16 %v664
    %v685 = vunpack.c.l.b16 %v665
    %v686 = vunpack.c.l.b16 %v666
    %v687 = vunpack.c.l.b16 %v667
    %v688 = vunpack.c.l.b16 %v668
    %v689 = vunpack.c.l.b16 %v669
    %v690 = vunpack.c.l.b16 %v670
    %v691 = vunpack.c.l.b16 %v671
    %v692 = vpack.c.b16 %v685, %v684
    %v693 = vpack.c.b16 %v687, %v686
    %v694 = vpack.c.b16 %v689, %v688
    %v695 = vpack.c.b16 %v691, %v690
    %v701 = vsel %vm591, %v663, 0
    %703 = vmatpush.bf16.msra.mxu0 0
    %704 = vmatpush.bf16.msra.mxu0 0
    %705 = vmatpush.bf16.msra.mxu0 0
    %706 = vmatpush.bf16.msra.mxu0 0
    %707 = vmatpush.bf16.msra.mxu0 %v695
    %708 = vmatpush.bf16.msra.mxu0 %v694
    %709 = vmatpush.bf16.msra.mxu0 %v693
    %710 = vmatpush.bf16.msra.mxu0 %v692
    %711 = vmatmul.bf16.gmra.mxu0 %v701
    %v712 = vpop.f32.mrf.mxu0
    %v713 = vadd.f32 %v674, %v712
    %v714 = vpop.f32.mrf.mxu0
    %715 = vdwg.mxu0
    %vm716 = vcmask 80896
    %v717 = vsel %vm716, %v713, -inf
    %718 = vmax.xlane.f32.xlu0 %v717
    %v719 = vpop.xlane.xlu0 %718
    %v720 = vsub.f32 %v713, %v719
    %v721 = vmul.f32 %v720, 1.442695
    %v722 = vpow.pop %v721
    %v723 = vsel %vm716, %v722, 0.0
    %724 = vadd.xlane.f32.xlu0 %v723
    %v725 = vpop.xlane.xlu0 %724
    %v726 = vlog2.pop %v725
    %v727 = vmul.f32 %v726, 0.6931472
    %v728 = vsub.f32 %v720, %v727
    %729 = vst.msk [vmem:[#allocation2] sm:$0xff] %vm716, %v728
    // Predicated region
    $region38: #{net_forward.1} parent=1 // pred_check
      _
    $region39: #{net_forward.1} parent=1 // pred_check_branch
      %731 = sbr.rel (0) target = $region41
    $region40: #{net_forward.1} parent=1 // pred_region
      %733 = vsyncadd [#allocation3], 0
      %s735 = sshll.u32 [#allocation2], 4
      %s736 = int_to_ptr.vmem [resolvable:$true] %s735
      %s737 = sshll.u32 %s9, 4
      %s738 = int_to_ptr.hbm [resolvable:$true] %s737
      %740 = dma.vmem_to_hbm [thread:$0]  %s736, 128, %s738, [#allocation3]
    $region41: #{net_forward.1} parent=1 // pred_fallthru
      _
    // Predicated region
    $region42: #{net_forward.1} parent=1 // pred_check
      _
    $region43: #{net_forward.1} parent=1 // pred_check_branch
      %742 = sbr.rel (0) target = $region45
    $region44: #{net_forward.1} parent=1 // pred_region
      %744 = dma.done [#allocation3], 128
    $region45: #{net_forward.1} parent=1 // pred_fallthru
      _
    %745 = vsyncpa [#allocation3], 1

</llo_original>
